<compile_context>
chip_gen: v5e
topology: v5e:2x2
jax: 0.10.0
libtpu: 0.0.40
codegen_flags: <defaults>
</compile_context>

<pallas_src>
import jax
import jax.numpy as jnp
from jax.experimental import pallas as pl
from jax.experimental.pallas import tpu as pltpu


# --------------------------------------------------------------------------- #
# Helpers
# --------------------------------------------------------------------------- #
def _round_up(x, m):
    return -(-x // m) * m


def _vmem_budget_and_limit():
    """Generation-aware VMEM working-set budget and scoped-VMEM limit.

    v5e/v6e: 128 MiB physical -> ~51 MiB budget, ~76 MiB limit.
    v7x    :  64 MiB physical -> ~25 MiB budget, ~38 MiB limit.
    """
    try:
        cap = int(pltpu.get_tpu_info().vmem_capacity_bytes)
    except Exception:
        cap = 64 << 20          # conservative v7x floor
    return int(cap * 0.40), int(cap * 0.60)


def _pick_lane_tile(lo_min, extra, cin, cout_p, op_bytes, out_bytes, n_batch,
                    budget):
    """Pick the flattened-HW lane tile (multiple of 128) from the VMEM budget."""
    lo_cap = _round_up(lo_min, 128)
    # double-buffered output block + f32 accumulator + a couple of tap temporaries
    per_lane = 2 * cout_p * out_bytes + 4 * cout_p + 2 * cin * op_bytes
    resident = cin * (lo_cap + extra) * op_bytes     # whole image stays in VMEM
    avail = max(budget - resident, 0)
    tile = max(128, min(avail // per_lane, 8192) // 128 * 128)
    tile = min(tile, lo_cap)
    # v7x has 2 TensorCores: keep >= 2 units of parallel work when batch == 1.
    if n_batch == 1 and tile >= lo_cap and lo_min > 128:
        tile = max(128, _round_up(-(-lo_min // 2), 128))
    return tile


# --------------------------------------------------------------------------- #
# Pallas kernel (closure over static config)
# --------------------------------------------------------------------------- #
def _make_film_conv_kernel(k, wp, tile, n_tiles):
    taps = [(dy, dx) for dy in range(k) for dx in range(k)]

    def kernel(w_ref, gb_ref, x_ref, o_ref):
        # w_ref : (k*k, Coutp, Cin)  per-tap weight slices (operand dtype)
        # gb_ref: (1, 2, Coutp, 1)   [gamma, gamma*b_conv + beta]      (f32)
        # x_ref : (1, Cin, Lin)      padded image, flattened HW on lanes
        # o_ref : (1, Coutp, tile)   lane-dense output tile
        cout_p = o_ref.shape[1]
        if n_tiles == 1:
            base = None                                   # fully static demo path
        else:
            base = pl.multiple_of(pl.program_id(1) * tile, 128)

        acc = jnp.zeros((cout_p, tile), jnp.float32)
        for idx, (dy, dx) in enumerate(taps):
            s = dy * wp + dx                              # static lane offset of this tap
            if base is None:
                xt = x_ref[0, :, s:s + tile]              # static shifted view
            else:
                xt = x_ref[0, :, pl.ds(base + s, tile)]   # tile-offset shifted view
            acc = acc + jnp.dot(w_ref[idx], xt,
                                preferred_element_type=jnp.float32)   # MXU

        gamma = gb_ref[0, 0]                              # (Coutp, 1) -> lane broadcast
        beta = gb_ref[0, 1]                               # conv bias already folded in
        y = gamma * acc + beta                            # FiLM affine (VPU FMA)
        o_ref[0] = jnp.maximum(y, 0.1 * y).astype(o_ref.dtype)        # LeakyReLU(0.1)

    return kernel


# --------------------------------------------------------------------------- #
# Wrapper
# --------------------------------------------------------------------------- #
def film_conv_forward(x_nchw, brdf_emb, params, *, k=3, stride=1, pad=None,
                      operand_dtype=jnp.bfloat16, out_dtype=None):
    """FiLMConv.forward (batchNorm=False). x_nchw: (N, Cin, H, W); brdf_emb: (N, D)."""
    if pad is None or pad < 0:
        pad = (k - 1) // 2
    out_dtype = x_nchw.dtype if out_dtype is None else out_dtype

    w_conv = params["conv_w"]          # (Cout, Cin, k, k)   PyTorch OIHW
    b_conv = params["conv_b"]          # (Cout,)
    w_film = params["film_w"]          # (2*Cout, D)         PyTorch Linear weight
    b_film = params["film_b"]          # (2*Cout,)

    n, cin, h, w = x_nchw.shape
    cout = w_conv.shape[0]
    hp, wp = h + 2 * pad, w + 2 * pad
    ho1, wo1 = hp - k + 1, wp - k + 1            # stride-1 output extent

    # ---- FiLM generator hoisted to the wrapper (tiny GEMM); fold conv bias ----
    gb = brdf_emb.astype(jnp.float32) @ w_film.astype(jnp.float32).T \
         + b_film.astype(jnp.float32)                              # (N, 2*Cout)
    gamma = gb[:, :cout]
    beta = gamma * b_conv.astype(jnp.float32)[None, :] + gb[:, cout:]

    cout_p = _round_up(cout, 16)                                   # bf16 sublane tile
    gamma = jnp.pad(gamma, ((0, 0), (0, cout_p - cout)))
    beta = jnp.pad(beta, ((0, 0), (0, cout_p - cout)))
    gb_op = jnp.stack([gamma, beta], axis=1).reshape(n, 2, cout_p, 1)

    # ---- conv weight OIHW -> per-tap (k*k, Coutp, Cin) ----
    w_taps = jnp.transpose(w_conv, (2, 3, 0, 1)).reshape(k * k, cout, cin)
    w_taps = jnp.pad(w_taps, ((0, 0), (0, cout_p - cout), (0, 0))).astype(operand_dtype)

    # ---- input: spatial zero-pad once, flatten HW onto the lane axis ----
    xp = jnp.pad(x_nchw, ((0, 0), (0, 0), (pad, pad), (pad, pad))).astype(operand_dtype)
    xflat = xp.reshape(n, cin, hp * wp)

    lo_min = ho1 * wp                                    # valid flattened output extent
    extra = _round_up((k - 1) * wp + (k - 1), 128)       # halo read past the last tile
    op_bytes = jnp.dtype(operand_dtype).itemsize
    out_bytes = jnp.dtype(out_dtype).itemsize
    budget, vmem_limit = _vmem_budget_and_limit()
    tile = _pick_lane_tile(lo_min, extra, cin, cout_p, op_bytes, out_bytes, n, budget)
    n_tiles = -(-lo_min // tile)
    lo = n_tiles * tile
    lin = lo + extra
    xflat = jnp.pad(xflat, ((0, 0), (0, 0), (0, lin - hp * wp)))

    kernel = _make_film_conv_kernel(k, wp, tile, n_tiles)
    out = pl.pallas_call(
        kernel,
        out_shape=jax.ShapeDtypeStruct((n, cout_p, lo), out_dtype),
        grid_spec=pltpu.PrefetchScalarGridSpec(
            num_scalar_prefetch=0,
            grid=(n, n_tiles),
            in_specs=[
                pl.BlockSpec((k * k, cout_p, cin), lambda b, t: (0, 0, 0)),   # weights (resident)
                pl.BlockSpec((1, 2, cout_p, 1), lambda b, t: (b, 0, 0, 0)),   # gamma / beta'
                pl.BlockSpec((1, cin, lin), lambda b, t: (b, 0, 0)),          # image (resident per batch)
            ],
            out_specs=pl.BlockSpec((1, cout_p, tile), lambda b, t: (b, 0, t)),
        ),
        compiler_params=pltpu.CompilerParams(
            dimension_semantics=("parallel", "parallel"),
            vmem_limit_bytes=vmem_limit),
    )(w_taps, gb_op, xflat)

    # ---- drop padding; un-flatten (valid columns are the first wo1 of each wp) ----
    y = out[:, :cout, :ho1 * wp].reshape(n, cout, ho1, wp)[:, :, :, :wo1]
    if stride != 1:
        y = y[:, :, ::stride, ::stride]
    return y


# --------------------------------------------------------------------------- #
# Pure-JAX reference (mirrors the PyTorch forward, batchNorm=False)
# --------------------------------------------------------------------------- #
def _reference_forward(x_nchw, brdf_emb, params, *, k=3, stride=1, pad=None):
    if pad is None or pad < 0:
        pad = (k - 1) // 2
    y = jax.lax.conv_general_dilated(
        x_nchw, params["conv_w"], window_strides=(stride, stride),
        padding=[(pad, pad), (pad, pad)],
        dimension_numbers=("NCHW", "OIHW", "NCHW"))
    y = y + params["conv_b"].reshape(1, -1, 1, 1)
    gb = brdf_emb @ params["film_w"].T + params["film_b"]
    cout = params["conv_w"].shape[0]
    gamma = gb[:, :cout].reshape(gb.shape[0], cout, 1, 1)
    beta = gb[:, cout:].reshape(gb.shape[0], cout, 1, 1)
    y = gamma * y + beta
    return jnp.where(y >= 0, y, 0.1 * y)


if __name__ == "__main__":
    N, CIN, COUT, H, W = 2, 4, 8, 16, 16
    K, STRIDE = 3, 1
    BRDF_EMB_DIM = 32

    key = jax.random.PRNGKey(0)
    kx, ke, kw, kb, kfw, kfb = jax.random.split(key, 6)

    x = jax.random.normal(kx, (N, CIN, H, W), dtype=jnp.float32)
    brdf_emb = jax.random.normal(ke, (N, BRDF_EMB_DIM), dtype=jnp.float32)

    # Small non-trivial FiLM params so the gamma/beta path is actually exercised
    # (the module's init would give gamma=1, beta=0 exactly).
    params = {
        "conv_w": 0.1 * jax.random.normal(kw, (COUT, CIN, K, K), dtype=jnp.float32),
        "conv_b": 0.05 * jax.random.normal(kb, (COUT,), dtype=jnp.float32),
        "film_w": 0.02 * jax.random.normal(kfw, (2 * COUT, BRDF_EMB_DIM), dtype=jnp.float32),
        "film_b": jnp.concatenate(
            [jnp.ones((COUT,), jnp.float32), jnp.zeros((COUT,), jnp.float32)])
        + 0.05 * jax.random.normal(kfb, (2 * COUT,), dtype=jnp.float32),
    }

    ref = _reference_forward(x, brdf_emb, params, k=K, stride=STRIDE)

    # f32 operands + f32 output: structural / numerical check.
    out_f32 = jax.block_until_ready(
        film_conv_forward(x, brdf_emb, params, k=K, stride=STRIDE,
                          operand_dtype=jnp.float32, out_dtype=jnp.float32))
    assert out_f32.shape == ref.shape
    assert jnp.allclose(out_f32, ref, atol=1e-3, rtol=1e-3), "f32 mismatch vs reference"

    # bf16 operands + bf16 output: the fast (default) path, looser tolerance.
    out_bf16 = jax.block_until_ready(
        film_conv_forward(x, brdf_emb, params, k=K, stride=STRIDE,
                          out_dtype=jnp.bfloat16))
    assert out_bf16.shape == ref.shape
    assert jnp.allclose(out_bf16.astype(jnp.float32), ref, atol=2e-2, rtol=2e-2), \
        "bf16 mismatch vs reference"

    print("KERNEL_OK")
</pallas_src>

<mosaic_0001>
module attributes {stable_mosaic.version = 11 : i64} {
  func.func @kernel(%arg0: i32, %arg1: i32, %arg2: memref<9x16x4xf32, #tpu.memory_space<vmem>>, %arg3: memref<1x2x16x1xf32, #tpu.memory_space<vmem>>, %arg4: memref<1x4x512xf32, #tpu.memory_space<vmem>>, %arg5: memref<1x16x384xf32, #tpu.memory_space<vmem>>) attributes {dimension_semantics = [#tpu.dimension_semantics<parallel>, #tpu.dimension_semantics<parallel>], iteration_bounds = array<i64: 2, 1>, scalar_prefetch = 0 : i64, scratch_operands = 0 : i64, tpu.core_type = #tpu.core_type<tc>, window_params = [{pipeline_mode = #tpu.pipeline_mode<synchronous>, transform_indices = @transform_0, window_bounds = array<i64: 9, 16, 4>}, {transform_indices = @transform_1, window_bounds = array<i64: 1, 2, 16, 1>}, {transform_indices = @transform_2, window_bounds = array<i64: 1, 4, 512>}, {transform_indices = @transform_3, window_bounds = array<i64: 1, 16, 384>}]} {
    %cst = arith.constant 0.000000e+00 : f32
    %0 = vector.broadcast %cst : f32 to vector<16x384xf32>
    %c0 = arith.constant 0 : index
    %c0_0 = arith.constant 0 : index
    %c0_1 = arith.constant 0 : index
    %1 = vector.load %arg4[%c0, %c0_0, %c0_1] : memref<1x4x512xf32, #tpu.memory_space<vmem>>, vector<1x4x384xf32>
    %2 = vector.shape_cast %1 : vector<1x4x384xf32> to vector<4x384xf32>
    %c0_2 = arith.constant 0 : index
    %c0_3 = arith.constant 0 : index
    %c0_4 = arith.constant 0 : index
    %3 = vector.load %arg2[%c0_2, %c0_3, %c0_4] : memref<9x16x4xf32, #tpu.memory_space<vmem>>, vector<1x16x4xf32>
    %4 = vector.shape_cast %3 : vector<1x16x4xf32> to vector<16x4xf32>
    %cst_5 = arith.constant dense<0.000000e+00> : vector<16x384xf32>
    %5 = tpu.matmul %4, %2, %cst_5 {dimension_numbers = #tpu.dot_dimension_numbers<[1], [0], [0], [1], [0, 0, 1, 1], [], []>} : vector<16x4xf32>, vector<4x384xf32>, vector<16x384xf32> -> vector<16x384xf32>
    %6 = arith.addf %0, %5 : vector<16x384xf32>
    %c0_6 = arith.constant 0 : index
    %c0_7 = arith.constant 0 : index
    %c1 = arith.constant 1 : index
    %7 = vector.load %arg4[%c0_6, %c0_7, %c1] : memref<1x4x512xf32, #tpu.memory_space<vmem>>, vector<1x4x384xf32>
    %8 = vector.shape_cast %7 : vector<1x4x384xf32> to vector<4x384xf32>
    %c1_8 = arith.constant 1 : index
    %c0_9 = arith.constant 0 : index
    %c0_10 = arith.constant 0 : index
    %9 = vector.load %arg2[%c1_8, %c0_9, %c0_10] : memref<9x16x4xf32, #tpu.memory_space<vmem>>, vector<1x16x4xf32>
    %10 = vector.shape_cast %9 : vector<1x16x4xf32> to vector<16x4xf32>
    %cst_11 = arith.constant dense<0.000000e+00> : vector<16x384xf32>
    %11 = tpu.matmul %10, %8, %cst_11 {dimension_numbers = #tpu.dot_dimension_numbers<[1], [0], [0], [1], [0, 0, 1, 1], [], []>} : vector<16x4xf32>, vector<4x384xf32>, vector<16x384xf32> -> vector<16x384xf32>
    %12 = arith.addf %6, %11 : vector<16x384xf32>
    %c0_12 = arith.constant 0 : index
    %c0_13 = arith.constant 0 : index
    %c2 = arith.constant 2 : index
    %13 = vector.load %arg4[%c0_12, %c0_13, %c2] : memref<1x4x512xf32, #tpu.memory_space<vmem>>, vector<1x4x384xf32>
    %14 = vector.shape_cast %13 : vector<1x4x384xf32> to vector<4x384xf32>
    %c2_14 = arith.constant 2 : index
    %c0_15 = arith.constant 0 : index
    %c0_16 = arith.constant 0 : index
    %15 = vector.load %arg2[%c2_14, %c0_15, %c0_16] : memref<9x16x4xf32, #tpu.memory_space<vmem>>, vector<1x16x4xf32>
    %16 = vector.shape_cast %15 : vector<1x16x4xf32> to vector<16x4xf32>
    %cst_17 = arith.constant dense<0.000000e+00> : vector<16x384xf32>
    %17 = tpu.matmul %16, %14, %cst_17 {dimension_numbers = #tpu.dot_dimension_numbers<[1], [0], [0], [1], [0, 0, 1, 1], [], []>} : vector<16x4xf32>, vector<4x384xf32>, vector<16x384xf32> -> vector<16x384xf32>
    %18 = arith.addf %12, %17 : vector<16x384xf32>
    %c0_18 = arith.constant 0 : index
    %c0_19 = arith.constant 0 : index
    %c18 = arith.constant 18 : index
    %19 = vector.load %arg4[%c0_18, %c0_19, %c18] : memref<1x4x512xf32, #tpu.memory_space<vmem>>, vector<1x4x384xf32>
    %20 = vector.shape_cast %19 : vector<1x4x384xf32> to vector<4x384xf32>
    %c3 = arith.constant 3 : index
    %c0_20 = arith.constant 0 : index
    %c0_21 = arith.constant 0 : index
    %21 = vector.load %arg2[%c3, %c0_20, %c0_21] : memref<9x16x4xf32, #tpu.memory_space<vmem>>, vector<1x16x4xf32>
    %22 = vector.shape_cast %21 : vector<1x16x4xf32> to vector<16x4xf32>
    %cst_22 = arith.constant dense<0.000000e+00> : vector<16x384xf32>
    %23 = tpu.matmul %22, %20, %cst_22 {dimension_numbers = #tpu.dot_dimension_numbers<[1], [0], [0], [1], [0, 0, 1, 1], [], []>} : vector<16x4xf32>, vector<4x384xf32>, vector<16x384xf32> -> vector<16x384xf32>
    %24 = arith.addf %18, %23 : vector<16x384xf32>
    %c0_23 = arith.constant 0 : index
    %c0_24 = arith.constant 0 : index
    %c19 = arith.constant 19 : index
    %25 = vector.load %arg4[%c0_23, %c0_24, %c19] : memref<1x4x512xf32, #tpu.memory_space<vmem>>, vector<1x4x384xf32>
    %26 = vector.shape_cast %25 : vector<1x4x384xf32> to vector<4x384xf32>
    %c4 = arith.constant 4 : index
    %c0_25 = arith.constant 0 : index
    %c0_26 = arith.constant 0 : index
    %27 = vector.load %arg2[%c4, %c0_25, %c0_26] : memref<9x16x4xf32, #tpu.memory_space<vmem>>, vector<1x16x4xf32>
    %28 = vector.shape_cast %27 : vector<1x16x4xf32> to vector<16x4xf32>
    %cst_27 = arith.constant dense<0.000000e+00> : vector<16x384xf32>
    %29 = tpu.matmul %28, %26, %cst_27 {dimension_numbers = #tpu.dot_dimension_numbers<[1], [0], [0], [1], [0, 0, 1, 1], [], []>} : vector<16x4xf32>, vector<4x384xf32>, vector<16x384xf32> -> vector<16x384xf32>
    %30 = arith.addf %24, %29 : vector<16x384xf32>
    %c0_28 = arith.constant 0 : index
    %c0_29 = arith.constant 0 : index
    %c20 = arith.constant 20 : index
    %31 = vector.load %arg4[%c0_28, %c0_29, %c20] : memref<1x4x512xf32, #tpu.memory_space<vmem>>, vector<1x4x384xf32>
    %32 = vector.shape_cast %31 : vector<1x4x384xf32> to vector<4x384xf32>
    %c5 = arith.constant 5 : index
    %c0_30 = arith.constant 0 : index
    %c0_31 = arith.constant 0 : index
    %33 = vector.load %arg2[%c5, %c0_30, %c0_31] : memref<9x16x4xf32, #tpu.memory_space<vmem>>, vector<1x16x4xf32>
    %34 = vector.shape_cast %33 : vector<1x16x4xf32> to vector<16x4xf32>
    %cst_32 = arith.constant dense<0.000000e+00> : vector<16x384xf32>
    %35 = tpu.matmul %34, %32, %cst_32 {dimension_numbers = #tpu.dot_dimension_numbers<[1], [0], [0], [1], [0, 0, 1, 1], [], []>} : vector<16x4xf32>, vector<4x384xf32>, vector<16x384xf32> -> vector<16x384xf32>
    %36 = arith.addf %30, %35 : vector<16x384xf32>
    %c0_33 = arith.constant 0 : index
    %c0_34 = arith.constant 0 : index
    %c36 = arith.constant 36 : index
    %37 = vector.load %arg4[%c0_33, %c0_34, %c36] : memref<1x4x512xf32, #tpu.memory_space<vmem>>, vector<1x4x384xf32>
    %38 = vector.shape_cast %37 : vector<1x4x384xf32> to vector<4x384xf32>
    %c6 = arith.constant 6 : index
    %c0_35 = arith.constant 0 : index
    %c0_36 = arith.constant 0 : index
    %39 = vector.load %arg2[%c6, %c0_35, %c0_36] : memref<9x16x4xf32, #tpu.memory_space<vmem>>, vector<1x16x4xf32>
    %40 = vector.shape_cast %39 : vector<1x16x4xf32> to vector<16x4xf32>
    %cst_37 = arith.constant dense<0.000000e+00> : vector<16x384xf32>
    %41 = tpu.matmul %40, %38, %cst_37 {dimension_numbers = #tpu.dot_dimension_numbers<[1], [0], [0], [1], [0, 0, 1, 1], [], []>} : vector<16x4xf32>, vector<4x384xf32>, vector<16x384xf32> -> vector<16x384xf32>
    %42 = arith.addf %36, %41 : vector<16x384xf32>
    %c0_38 = arith.constant 0 : index
    %c0_39 = arith.constant 0 : index
    %c37 = arith.constant 37 : index
    %43 = vector.load %arg4[%c0_38, %c0_39, %c37] : memref<1x4x512xf32, #tpu.memory_space<vmem>>, vector<1x4x384xf32>
    %44 = vector.shape_cast %43 : vector<1x4x384xf32> to vector<4x384xf32>
    %c7 = arith.constant 7 : index
    %c0_40 = arith.constant 0 : index
    %c0_41 = arith.constant 0 : index
    %45 = vector.load %arg2[%c7, %c0_40, %c0_41] : memref<9x16x4xf32, #tpu.memory_space<vmem>>, vector<1x16x4xf32>
    %46 = vector.shape_cast %45 : vector<1x16x4xf32> to vector<16x4xf32>
    %cst_42 = arith.constant dense<0.000000e+00> : vector<16x384xf32>
    %47 = tpu.matmul %46, %44, %cst_42 {dimension_numbers = #tpu.dot_dimension_numbers<[1], [0], [0], [1], [0, 0, 1, 1], [], []>} : vector<16x4xf32>, vector<4x384xf32>, vector<16x384xf32> -> vector<16x384xf32>
    %48 = arith.addf %42, %47 : vector<16x384xf32>
    %c0_43 = arith.constant 0 : index
    %c0_44 = arith.constant 0 : index
    %c38 = arith.constant 38 : index
    %49 = vector.load %arg4[%c0_43, %c0_44, %c38] : memref<1x4x512xf32, #tpu.memory_space<vmem>>, vector<1x4x384xf32>
    %50 = vector.shape_cast %49 : vector<1x4x384xf32> to vector<4x384xf32>
    %c8 = arith.constant 8 : index
    %c0_45 = arith.constant 0 : index
    %c0_46 = arith.constant 0 : index
    %51 = vector.load %arg2[%c8, %c0_45, %c0_46] : memref<9x16x4xf32, #tpu.memory_space<vmem>>, vector<1x16x4xf32>
    %52 = vector.shape_cast %51 : vector<1x16x4xf32> to vector<16x4xf32>
    %cst_47 = arith.constant dense<0.000000e+00> : vector<16x384xf32>
    %53 = tpu.matmul %52, %50, %cst_47 {dimension_numbers = #tpu.dot_dimension_numbers<[1], [0], [0], [1], [0, 0, 1, 1], [], []>} : vector<16x4xf32>, vector<4x384xf32>, vector<16x384xf32> -> vector<16x384xf32>
    %54 = arith.addf %48, %53 : vector<16x384xf32>
    %c0_48 = arith.constant 0 : index
    %c0_49 = arith.constant 0 : index
    %c0_50 = arith.constant 0 : index
    %c0_51 = arith.constant 0 : index
    %55 = vector.load %arg3[%c0_48, %c0_49, %c0_50, %c0_51] : memref<1x2x16x1xf32, #tpu.memory_space<vmem>>, vector<1x1x16x1xf32>
    %56 = vector.shape_cast %55 : vector<1x1x16x1xf32> to vector<16x1xf32>
    %c0_52 = arith.constant 0 : index
    %c1_53 = arith.constant 1 : index
    %c0_54 = arith.constant 0 : index
    %c0_55 = arith.constant 0 : index
    %57 = vector.load %arg3[%c0_52, %c1_53, %c0_54, %c0_55] : memref<1x2x16x1xf32, #tpu.memory_space<vmem>>, vector<1x1x16x1xf32>
    %58 = vector.shape_cast %57 : vector<1x1x16x1xf32> to vector<16x1xf32>
    %59 = vector.broadcast %56 : vector<16x1xf32> to vector<16x384xf32>
    %60 = arith.mulf %59, %54 : vector<16x384xf32>
    %61 = vector.broadcast %58 : vector<16x1xf32> to vector<16x384xf32>
    %62 = arith.addf %60, %61 : vector<16x384xf32>
    %cst_56 = arith.constant 1.000000e-01 : f32
    %63 = vector.broadcast %cst_56 : f32 to vector<16x384xf32>
    %64 = arith.mulf %63, %62 : vector<16x384xf32>
    %65 = arith.maximumf %62, %64 : vector<16x384xf32>
    %c0_57 = arith.constant 0 : index
    %c0_58 = arith.constant 0 : index
    %c0_59 = arith.constant 0 : index
    %66 = vector.load %arg5[%c0_57, %c0_58, %c0_59] : memref<1x16x384xf32, #tpu.memory_space<vmem>>, vector<1x16x384xf32>
    %67 = vector.shape_cast %66 : vector<1x16x384xf32> to vector<16x384xf32>
    %68 = vector.shape_cast %65 : vector<16x384xf32> to vector<1x16x384xf32>
    tpu.vector_store %arg5[%c0_57, %c0_58, %c0_59], %68 {strides = array<i32>} : memref<1x16x384xf32, #tpu.memory_space<vmem>>, vector<1x16x384xf32>,
    return
  }
  func.func @transform_0(%arg0: i32, %arg1: i32) -> (i32, i32, i32) {
    %c0_i32 = arith.constant 0 : i32
    %c0_i32_0 = arith.constant 0 : i32
    %c0_i32_1 = arith.constant 0 : i32
    %c0_i32_2 = arith.constant 0 : i32
    return %c0_i32, %c0_i32_0, %c0_i32_1 : i32, i32, i32
  }
  func.func @transform_1(%arg0: i32, %arg1: i32) -> (i32, i32, i32, i32) {
    %c0_i32 = arith.constant 0 : i32
    %c0_i32_0 = arith.constant 0 : i32
    %c0_i32_1 = arith.constant 0 : i32
    %c0_i32_2 = arith.constant 0 : i32
    return %arg0, %c0_i32, %c0_i32_0, %c0_i32_1 : i32, i32, i32, i32
  }
  func.func @transform_2(%arg0: i32, %arg1: i32) -> (i32, i32, i32) {
    %c0_i32 = arith.constant 0 : i32
    %c0_i32_0 = arith.constant 0 : i32
    %c0_i32_1 = arith.constant 0 : i32
    return %arg0, %c0_i32, %c0_i32_0 : i32, i32, i32
  }
  func.func @transform_3(%arg0: i32, %arg1: i32) -> (i32, i32, i32) {
    %c0_i32 = arith.constant 0 : i32
    %c0_i32_0 = arith.constant 0 : i32
    return %arg0, %c0_i32, %arg1 : i32, i32, i32
  }
}

</mosaic_0001>

<llo_original>
// kernel: tpu_custom_call.1
$region0: #{tpu_custom_call.1}
  #allocation0 [shape = 'u32[]', space=smem, size = 0x4, offset = 0x4, fixed_abs, tag = 'smem constant byte address 0x4 - core index']
  #allocation1 [shape = 'u32[72,128]{1,0:T(1,128)}', space=vmem, size = 0x9000, scoped, tag = 'internal scratch']
  %s0 = inlined_call_operand.vmem [shape: f32[9,16,4], index: 0, kind: input, shape index: {}]
  %s1 = inlined_call_operand.vmem [shape: f32[2,2,16,1], index: 1, kind: input, shape index: {}]
  %s2 = inlined_call_operand.vmem [shape: f32[2,4,512], index: 2, kind: input, shape index: {}]
  %s3 = inlined_call_operand.hbm [shape: f32[2,16,384], index: 3, kind: output, shape index: {}]
  %s4 = sld [smem:[#allocation0]]
  $region45: #{tpu_custom_call.1} parent=0
    _
  %s6 = ssub.s32 1, %s4
  %s7 = scalar_select 0, %s6, %s4
  $region1: #{tpu_custom_call.1} parent=0
    #allocation2 [shape = 'u8[49152]{0}', space=vmem, size = 0xc000, scoped, tag = 'output window, operand 0']
    #allocation3 [shape = 's32[2]{0}', space=sflag, size = 0x8, scoped, tag = 'scoped memory for tpu_custom_call.1']
    %8 = vsyncpa [#allocation3], 0
    %s9 = scalar_lea.sflag [#allocation3], 1
    %10 = vsyncpa %s9, 0
    loop: start=0, step=1, limit=4
    $region2: #{tpu_custom_call.1} parent=1 // loop_pre_header
      _
    $region3: #{tpu_custom_call.1} parent=1 // loop_header
      %s12 = sphi 0, %s16
      %p13 = scmp.ge.s32.totalorder %s12, 4
      %s19 = sphi 0, %s31
      %s20 = sphi 0, %s27
      %s21 = sphi 0, %s19
      %s22 = sphi 0, %s20
      %s23 = sphi 0, %s21
      %s24 = sphi 0, %s22
      %s32 = sphi 0, %s32
      %s34 = sphi 0, %s32
      %s35 = sphi 0, %s34
      %s49 = sphi 0, %s35
      %s55 = sphi 0, %s57
      %s58 = sphi 0, %s55
      %s59 = sphi 0, %s58
      %s75 = sphi 0, %s59
      %s81 = sphi 0, %s83
      %s84 = sphi 0, %s81
      %s85 = sphi 0, %s84
      %s101 = sphi 0, %s85
      %s109 = sphi 0, %s111
      %s112 = sphi 0, %s109
      %s113 = sphi 0, %s112
      %s129 = sphi 0, %s113
    $region4: #{tpu_custom_call.1} parent=1 // loop_header_branch
      %15 = sbr.rel (%p13) target = $region8
    $region5: #{tpu_custom_call.1} parent=1 // loop_body
      %s17 = ssub.s32 %s12, 1
      %s18 = ssub.s32 %s12, 2
      %s25 = sadd.s32 1, %s20
      %p26 = scmp.ge.s32.totalorder %s25, 1
      %s27 = scalar_select %p26, 0, %s25
      %s28 = sadd.s32 1, %s19
      %s29 = scalar_select %p26, %s28, %s19
      %p30 = scmp.ge.s32.totalorder %s29, 2
      %s31 = scalar_select %p30, 0, %s29
      %s33 = sadd.s32 %s32, 1
      %p36 = scmp.eq.s32.totalorder %s12, 1
      %p37 = scmp.ne.s32.totalorder %s32, %s34
      %p38 = scmp.eq.s32.totalorder %s12, 0
      %p39 = por %p37, %p38
      %p40 = scmp.ne.s32.totalorder %s32, %s34
      %p41 = scmp.eq.s32.totalorder %s17, 1
      %p42 = por %p40, %p41
      %p43 = scmp.ne.s32.totalorder %s34, %s35
      %p44 = scmp.eq.s32.totalorder %s17, 0
      %p45 = por %p43, %p44
      %p46 = scmp.ne.s32.totalorder %s34, %s35
      %p47 = scmp.eq.s32.totalorder %s18, 1
      %p48 = por %p46, %p47
      %p50 = scmp.ne.s32.totalorder %s35, %s49
      %p51 = scmp.eq.s32.totalorder %s18, 0
      %p52 = por %p50, %p51
      %s53 = ssub.s32 %s19, %s31
      %p54 = scmp.eq.s32.totalorder %s53, 0
      %s56 = sadd.s32 %s55, 1
      %s57 = scalar_select %p54, %s55, %s56
      %p60 = pneg %p54
      %p61 = scmp.eq.s32.totalorder %s12, 1
      %p62 = por %p60, %p61
      %p63 = scmp.ne.s32.totalorder %s55, %s58
      %p64 = scmp.eq.s32.totalorder %s12, 0
      %p65 = por %p63, %p64
      %p66 = scmp.ne.s32.totalorder %s55, %s58
      %p67 = scmp.eq.s32.totalorder %s17, 1
      %p68 = por %p66, %p67
      %p69 = scmp.ne.s32.totalorder %s58, %s59
      %p70 = scmp.eq.s32.totalorder %s17, 0
      %p71 = por %p69, %p70
      %p72 = scmp.ne.s32.totalorder %s58, %s59
      %p73 = scmp.eq.s32.totalorder %s18, 1
      %p74 = por %p72, %p73
      %p76 = scmp.ne.s32.totalorder %s59, %s75
      %p77 = scmp.eq.s32.totalorder %s18, 0
      %p78 = por %p76, %p77
      %s79 = ssub.s32 %s19, %s31
      %p80 = scmp.eq.s32.totalorder %s79, 0
      %s82 = sadd.s32 %s81, 1
      %s83 = scalar_select %p80, %s81, %s82
      %p86 = pneg %p80
      %p87 = scmp.eq.s32.totalorder %s12, 1
      %p88 = por %p86, %p87
      %p89 = scmp.ne.s32.totalorder %s81, %s84
      %p90 = scmp.eq.s32.totalorder %s12, 0
      %p91 = por %p89, %p90
      %p92 = scmp.ne.s32.totalorder %s81, %s84
      %p93 = scmp.eq.s32.totalorder %s17, 1
      %p94 = por %p92, %p93
      %p95 = scmp.ne.s32.totalorder %s84, %s85
      %p96 = scmp.eq.s32.totalorder %s17, 0
      %p97 = por %p95, %p96
      %p98 = scmp.ne.s32.totalorder %s84, %s85
      %p99 = scmp.eq.s32.totalorder %s18, 1
      %p100 = por %p98, %p99
      %p102 = scmp.ne.s32.totalorder %s85, %s101
      %p103 = scmp.eq.s32.totalorder %s18, 0
      %p104 = por %p102, %p103
      %s105 = ssub.s32 %s19, %s31
      %s106 = ssub.s32 %s20, %s27
      %s107 = sor.u32 %s105, %s106
      %p108 = scmp.eq.s32.totalorder %s107, 0
      %s110 = sadd.s32 %s109, 1
      %s111 = scalar_select %p108, %s109, %s110
      %p114 = pneg %p108
      %p115 = scmp.eq.s32.totalorder %s12, 1
      %p116 = por %p114, %p115
      %p117 = scmp.ne.s32.totalorder %s109, %s112
      %p118 = scmp.eq.s32.totalorder %s12, 0
      %p119 = por %p117, %p118
      %p120 = scmp.ne.s32.totalorder %s109, %s112
      %p121 = scmp.eq.s32.totalorder %s17, 1
      %p122 = por %p120, %p121
      %p123 = scmp.ne.s32.totalorder %s112, %s113
      %p124 = scmp.eq.s32.totalorder %s17, 0
      %p125 = por %p123, %p124
      %p126 = scmp.ne.s32.totalorder %s112, %s113
      %p127 = scmp.eq.s32.totalorder %s18, 1
      %p128 = por %p126, %p127
      %p130 = scmp.ne.s32.totalorder %s113, %s129
      %p131 = scmp.eq.s32.totalorder %s18, 0
      %p132 = por %p130, %p131
      %p133 = scmp.le.s32.totalorder 1, %s12
      %p134 = scmp.lt.s32.totalorder %s12, 3
      %p135 = pnand %p133, %p134
      %p136 = pneg %p135
      // Predicated region
      $region9: #{tpu_custom_call.1} parent=5 // pred_check
        _
      $region10: #{tpu_custom_call.1} parent=5 // pred_check_branch
        %138 = sbr.rel (%p135) target = $region12
      $region11: #{tpu_custom_call.1} parent=5 // pred_region
        %s139 = ssub.s32 %s12, 1
        // Predicated region
        $region13: #{tpu_custom_call.1} parent=11 // pred_check
          %p140 = pneg %p45
        $region14: #{tpu_custom_call.1} parent=11 // pred_check_branch
          %142 = sbr.rel (%p140) target = $region16
        $region15: #{tpu_custom_call.1} parent=11 // pred_region
          _
        $region16: #{tpu_custom_call.1} parent=11 // pred_fallthru
          _
      $region12: #{tpu_custom_call.1} parent=5 // pred_fallthru
        _
      %p143 = scmp.lt.s32.totalorder %s12, 2
      // Predicated region
      $region17: #{tpu_custom_call.1} parent=5 // pred_check
        %p144 = pneg %p143
      $region18: #{tpu_custom_call.1} parent=5 // pred_check_branch
        %146 = sbr.rel (%p144) target = $region20
      $region19: #{tpu_custom_call.1} parent=5 // pred_region
        // Predicated region
        $region21: #{tpu_custom_call.1} parent=19 // pred_check
          %p147 = pneg %p65
        $region22: #{tpu_custom_call.1} parent=19 // pred_check_branch
          %149 = sbr.rel (%p147) target = $region24
        $region23: #{tpu_custom_call.1} parent=19 // pred_region
          %p150 = scmp.lt.s32.totalorder %s19, 1
          %s151 = scalar_select %p150, %s19, 1
          %s152 = smul.addr %s151, 4
          %s153 = smul.addr %s152, 8
          %s154 = scalar_lea.vmem %s1, %s153
        $region24: #{tpu_custom_call.1} parent=19 // pred_fallthru
          _
        // Predicated region
        $region25: #{tpu_custom_call.1} parent=19 // pred_check
          %p155 = pneg %p91
        $region26: #{tpu_custom_call.1} parent=19 // pred_check_branch
          %157 = sbr.rel (%p155) target = $region28
        $region27: #{tpu_custom_call.1} parent=19 // pred_region
          %p158 = scmp.lt.s32.totalorder %s19, 1
          %s159 = scalar_select %p158, %s19, 1
          %s160 = smul.addr %s159, 4
          %s161 = smul.addr %s160, 4
          %s162 = scalar_lea.vmem %s2, %s161
        $region28: #{tpu_custom_call.1} parent=19 // pred_fallthru
          _
      $region20: #{tpu_custom_call.1} parent=5 // pred_fallthru
        _
      %p163 = scmp.le.s32.totalorder 1, %s12
      %p164 = scmp.lt.s32.totalorder %s12, 3
      %p165 = pnand %p163, %p164
      %p166 = pneg %p165
      // Predicated region
      $region29: #{tpu_custom_call.1} parent=5 // pred_check
        _
      $region30: #{tpu_custom_call.1} parent=5 // pred_check_branch
        %168 = sbr.rel (%p165) target = $region32
      $region31: #{tpu_custom_call.1} parent=5 // pred_region
        %s169 = ssub.s32 %s12, 1
        %p170 = pneg %p45
        %p171 = pneg %p42
        %p172 = scmp.lt.s32.totalorder %s21, 1
        %s173 = scalar_select %p172, %s21, 1
        %s174 = smul.addr %s173, 4
        %s175 = smul.addr %s174, 8
        %s176 = scalar_lea.vmem %s1, %s175
        %p177 = pneg %p71
        %p178 = pneg %p68
        %p179 = scmp.lt.s32.totalorder %s21, 1
        %s180 = scalar_select %p179, %s21, 1
        %s181 = smul.addr %s180, 4
        %s182 = smul.addr %s181, 4
        %s183 = scalar_lea.vmem %s2, %s182
        %p184 = pneg %p97
        %p185 = pneg %p94
        %p186 = pneg %p125
        %p187 = pneg %p122
        %s188 = sand.u32 %s112, 1
        %s189 = scalar_lea.sflag [#allocation3], %s188
        %s190 = sand.u32 %s112, 1
        %s191 = smul.addr %s190, 48
        %s192 = scalar_lea.vmem [#allocation2], %s191
        %p193 = scmp.lt.s32.totalorder %s21, 1
        %s194 = scalar_select %p193, %s21, 1
        %s195 = smul.addr %s194, 4
        %s196 = smul.addr %s195, 8
        %s197 = scalar_lea.vmem %s1, %s196
        %p198 = scmp.lt.s32.totalorder %s21, 1
        %s199 = scalar_select %p198, %s21, 1
        %s200 = smul.addr %s199, 4
        %s201 = smul.addr %s200, 4
        %s202 = scalar_lea.vmem %s2, %s201
        %s203 = smul.u32 3, %s22
        %v204 = vld [vmem:[%s202] sm:$0xff]
        %v205 = vld [vmem:[%s202 + $0x8] sm:$0xf]
        %v206 = vld [vmem:[%s0] sm:$0xff]
        %v207 = vld [vmem:[%s0 + $0x8] sm:$0xff]
        %v208 = vld [vmem:[%s202] sm:$0xff]
        %v209 = vld [vmem:[%s202 + $0x8] sm:$0xff]
        %s210 = scalar_lea.vmem %s0, 16
        %v211 = vld [vmem:[%s210] sm:$0xff]
        %v212 = vld [vmem:[%s210 + $0x8] sm:$0xff]
        %215 = vst [vmem:[#allocation1] ss:$2 sm:$0xff] %v208
        %s216 = scalar_lea.vmem [#allocation1], 16
        %217 = vst [vmem:[%s216] ss:$2 sm:$0xff] %v209
        %v218 = vld.sshfl [vmem:[#allocation1] sm:$0xff pattern:$0x75316420]
        %v219 = vld.sshfl [vmem:[#allocation1 + $0x8] sm:$0xff pattern:$0x75316420]
        %v220 = vld.sshfl [vmem:[#allocation1 + $0x10] sm:$0xff pattern:$0x75316420]
        %v221 = vld.sshfl [vmem:[#allocation1 + $0x18] sm:$0xff pattern:$0x75316420]
        %222 = vrot.lane.b32.xlu0 %v218, 127
        %v223 = vpop.permute.xlu0 %222
        %224 = vrot.lane.b32.xlu0 %v219, 127
        %v225 = vpop.permute.xlu0 %224
        %226 = vrot.lane.b32.xlu0 %v220, 127
        %v227 = vpop.permute.xlu0 %226
        %228 = vrot.lane.b32.xlu0 %v221, 127
        %v229 = vpop.permute.xlu0 %228
        %vm230 = vcmask 1039360
        %v231 = vsel %vm230, %v223, %v225
        %v232 = vsel %vm230, %v225, %v227
        %v233 = vsel %vm230, %v227, %v229
        %vm234 = vcmask 31744
        %v236 = vsel %vm234, %v211, 0
        %v239 = vsel %vm234, %v212, 0
        %vm241 = vcmask 1043456
        %v242 = vsel %vm241, %v231, 0
        %v244 = vsel %vm241, %v232, 0
        %v246 = vsel %vm241, %v233, 0
        %248 = vmatpush.msra.mxu0 0.0
        %249 = vmatpush.msra.mxu0 0.0
        %250 = vmatpush.msra.mxu0 0.0
        %251 = vmatpush.msra.mxu0 0.0
        %252 = vmatpush.msra.mxu0 0.0
        %253 = vmatpush.msra.mxu0 0.0
        %254 = vmatpush.msra.mxu0 0.0
        %255 = vmatpush.msra.mxu0 0.0
        %256 = vmatpush.msra.mxu0 0.0
        %257 = vmatpush.msra.mxu0 0.0
        %258 = vmatpush.msra.mxu0 0.0
        %259 = vmatpush.msra.mxu0 0.0
        %260 = vmatpush.msra.mxu0 0.0
        %261 = vmatpush.msra.mxu0 0.0
        %262 = vmatpush.msra.mxu0 0.0
        %263 = vmatpush.msra.mxu0 %v242
        %264 = vmatmul.f32.gmra.mxu0 %v236
        %v265 = vpop.f32.mrf.mxu0
        %v266 = vadd.f32 0.0, %v265
        %267 = vmatmul.f32.gmra.mxu0 %v239
        %v268 = vpop.f32.mrf.mxu0
        %v269 = vadd.f32 0.0, %v268
        %270 = vdwg.mxu0
        %271 = vmatpush.msra.mxu0 0.0
        %272 = vmatpush.msra.mxu0 0.0
        %273 = vmatpush.msra.mxu0 0.0
        %274 = vmatpush.msra.mxu0 0.0
        %275 = vmatpush.msra.mxu0 0.0
        %276 = vmatpush.msra.mxu0 0.0
        %277 = vmatpush.msra.mxu0 0.0
        %278 = vmatpush.msra.mxu0 0.0
        %279 = vmatpush.msra.mxu0 0.0
        %280 = vmatpush.msra.mxu0 0.0
        %281 = vmatpush.msra.mxu0 0.0
        %282 = vmatpush.msra.mxu0 0.0
        %283 = vmatpush.msra.mxu0 0.0
        %284 = vmatpush.msra.mxu0 0.0
        %285 = vmatpush.msra.mxu0 0.0
        %286 = vmatpush.msra.mxu0 %v244
        %287 = vmatmul.f32.gmra.mxu0 %v236
        %v288 = vpop.f32.mrf.mxu0
        %v289 = vadd.f32 0.0, %v288
        %290 = vmatmul.f32.gmra.mxu0 %v239
        %v291 = vpop.f32.mrf.mxu0
        %v292 = vadd.f32 0.0, %v291
        %293 = vdwg.mxu0
        %294 = vmatpush.msra.mxu0 0.0
        %295 = vmatpush.msra.mxu0 0.0
        %296 = vmatpush.msra.mxu0 0.0
        %297 = vmatpush.msra.mxu0 0.0
        %298 = vmatpush.msra.mxu0 0.0
        %299 = vmatpush.msra.mxu0 0.0
        %300 = vmatpush.msra.mxu0 0.0
        %301 = vmatpush.msra.mxu0 0.0
        %302 = vmatpush.msra.mxu0 0.0
        %303 = vmatpush.msra.mxu0 0.0
        %304 = vmatpush.msra.mxu0 0.0
        %305 = vmatpush.msra.mxu0 0.0
        %306 = vmatpush.msra.mxu0 0.0
        %307 = vmatpush.msra.mxu0 0.0
        %308 = vmatpush.msra.mxu0 0.0
        %309 = vmatpush.msra.mxu0 %v246
        %310 = vmatmul.f32.gmra.mxu0 %v236
        %v311 = vpop.f32.mrf.mxu0
        %v312 = vadd.f32 0.0, %v311
        %313 = vmatmul.f32.gmra.mxu0 %v239
        %v314 = vpop.f32.mrf.mxu0
        %v315 = vadd.f32 0.0, %v314
        %316 = vdwg.mxu0
        %319 = vst [vmem:[#allocation1] ss:$2 sm:$0xff] %v204
        %s320 = scalar_lea.vmem [#allocation1], 16
        %321 = vst [vmem:[%s320] ss:$2 sm:$0xff] %v205
        %v322 = vld.sshfl [vmem:[#allocation1] sm:$0xff pattern:$0x75316420]
        %v323 = vld.sshfl [vmem:[#allocation1 + $0x8] sm:$0xff pattern:$0x75316420]
        %v324 = vld.sshfl [vmem:[#allocation1 + $0x10] sm:$0xff pattern:$0x75316420]
        %v326 = vsel %vm234, %v206, 0
        %v329 = vsel %vm234, %v207, 0
        %v331 = vsel %vm241, %v322, 0
        %v333 = vsel %vm241, %v323, 0
        %v335 = vsel %vm241, %v324, 0
        %337 = vmatpush.msra.mxu0 0.0
        %338 = vmatpush.msra.mxu0 0.0
        %339 = vmatpush.msra.mxu0 0.0
        %340 = vmatpush.msra.mxu0 0.0
        %341 = vmatpush.msra.mxu0 0.0
        %342 = vmatpush.msra.mxu0 0.0
        %343 = vmatpush.msra.mxu0 0.0
        %344 = vmatpush.msra.mxu0 0.0
        %345 = vmatpush.msra.mxu0 0.0
        %346 = vmatpush.msra.mxu0 0.0
        %347 = vmatpush.msra.mxu0 0.0
        %348 = vmatpush.msra.mxu0 0.0
        %349 = vmatpush.msra.mxu0 0.0
        %350 = vmatpush.msra.mxu0 0.0
        %351 = vmatpush.msra.mxu0 0.0
        %352 = vmatpush.msra.mxu0 %v331
        %353 = vmatmul.f32.gmra.mxu0 %v326
        %v354 = vpop.f32.mrf.mxu0
        %v355 = vadd.f32 %v266, %v354
        %356 = vmatmul.f32.gmra.mxu0 %v329
        %v357 = vpop.f32.mrf.mxu0
        %v358 = vadd.f32 %v269, %v357
        %359 = vdwg.mxu0
        %360 = vmatpush.msra.mxu0 0.0
        %361 = vmatpush.msra.mxu0 0.0
        %362 = vmatpush.msra.mxu0 0.0
        %363 = vmatpush.msra.mxu0 0.0
        %364 = vmatpush.msra.mxu0 0.0
        %365 = vmatpush.msra.mxu0 0.0
        %366 = vmatpush.msra.mxu0 0.0
        %367 = vmatpush.msra.mxu0 0.0
        %368 = vmatpush.msra.mxu0 0.0
        %369 = vmatpush.msra.mxu0 0.0
        %370 = vmatpush.msra.mxu0 0.0
        %371 = vmatpush.msra.mxu0 0.0
        %372 = vmatpush.msra.mxu0 0.0
        %373 = vmatpush.msra.mxu0 0.0
        %374 = vmatpush.msra.mxu0 0.0
        %375 = vmatpush.msra.mxu0 %v333
        %376 = vmatmul.f32.gmra.mxu0 %v326
        %v377 = vpop.f32.mrf.mxu0
        %v378 = vadd.f32 %v289, %v377
        %379 = vmatmul.f32.gmra.mxu0 %v329
        %v380 = vpop.f32.mrf.mxu0
        %v381 = vadd.f32 %v292, %v380
        %382 = vdwg.mxu0
        %383 = vmatpush.msra.mxu0 0.0
        %384 = vmatpush.msra.mxu0 0.0
        %385 = vmatpush.msra.mxu0 0.0
        %386 = vmatpush.msra.mxu0 0.0
        %387 = vmatpush.msra.mxu0 0.0
        %388 = vmatpush.msra.mxu0 0.0
        %389 = vmatpush.msra.mxu0 0.0
        %390 = vmatpush.msra.mxu0 0.0
        %391 = vmatpush.msra.mxu0 0.0
        %392 = vmatpush.msra.mxu0 0.0
        %393 = vmatpush.msra.mxu0 0.0
        %394 = vmatpush.msra.mxu0 0.0
        %395 = vmatpush.msra.mxu0 0.0
        %396 = vmatpush.msra.mxu0 0.0
        %397 = vmatpush.msra.mxu0 0.0
        %398 = vmatpush.msra.mxu0 %v335
        %399 = vmatmul.f32.gmra.mxu0 %v326
        %v400 = vpop.f32.mrf.mxu0
        %v401 = vadd.f32 %v312, %v400
        %402 = vmatmul.f32.gmra.mxu0 %v329
        %v403 = vpop.f32.mrf.mxu0
        %v404 = vadd.f32 %v315, %v403
        %405 = vdwg.mxu0
        %v406 = vld [vmem:[%s202] sm:$0xff]
        %v407 = vld [vmem:[%s202 + $0x8] sm:$0xff]
        %s408 = scalar_lea.vmem %s0, 32
        %v409 = vld [vmem:[%s408] sm:$0xff]
        %v410 = vld [vmem:[%s408 + $0x8] sm:$0xff]
        %413 = vst [vmem:[#allocation1] ss:$2 sm:$0xff] %v406
        %s414 = scalar_lea.vmem [#allocation1], 16
        %415 = vst [vmem:[%s414] ss:$2 sm:$0xff] %v407
        %v416 = vld.sshfl [vmem:[#allocation1] sm:$0xff pattern:$0x75316420]
        %v417 = vld.sshfl [vmem:[#allocation1 + $0x8] sm:$0xff pattern:$0x75316420]
        %v418 = vld.sshfl [vmem:[#allocation1 + $0x10] sm:$0xff pattern:$0x75316420]
        %v419 = vld.sshfl [vmem:[#allocation1 + $0x18] sm:$0xff pattern:$0x75316420]
        %420 = vrot.lane.b32.xlu0 %v416, 126
        %v421 = vpop.permute.xlu0 %420
        %422 = vrot.lane.b32.xlu0 %v417, 126
        %v423 = vpop.permute.xlu0 %422
        %424 = vrot.lane.b32.xlu0 %v418, 126
        %v425 = vpop.permute.xlu0 %424
        %426 = vrot.lane.b32.xlu0 %v419, 126
        %v427 = vpop.permute.xlu0 %426
        %vm428 = vcmask 1031168
        %v429 = vsel %vm428, %v421, %v423
        %v430 = vsel %vm428, %v423, %v425
        %v431 = vsel %vm428, %v425, %v427
        %v433 = vsel %vm234, %v409, 0
        %v436 = vsel %vm234, %v410, 0
        %v438 = vsel %vm241, %v429, 0
        %v440 = vsel %vm241, %v430, 0
        %v442 = vsel %vm241, %v431, 0
        %444 = vmatpush.msra.mxu0 0.0
        %445 = vmatpush.msra.mxu0 0.0
        %446 = vmatpush.msra.mxu0 0.0
        %447 = vmatpush.msra.mxu0 0.0
        %448 = vmatpush.msra.mxu0 0.0
        %449 = vmatpush.msra.mxu0 0.0
        %450 = vmatpush.msra.mxu0 0.0
        %451 = vmatpush.msra.mxu0 0.0
        %452 = vmatpush.msra.mxu0 0.0
        %453 = vmatpush.msra.mxu0 0.0
        %454 = vmatpush.msra.mxu0 0.0
        %455 = vmatpush.msra.mxu0 0.0
        %456 = vmatpush.msra.mxu0 0.0
        %457 = vmatpush.msra.mxu0 0.0
        %458 = vmatpush.msra.mxu0 0.0
        %459 = vmatpush.msra.mxu0 %v438
        %460 = vmatmul.f32.gmra.mxu0 %v433
        %v461 = vpop.f32.mrf.mxu0
        %v462 = vadd.f32 0.0, %v461
        %463 = vmatmul.f32.gmra.mxu0 %v436
        %v464 = vpop.f32.mrf.mxu0
        %v465 = vadd.f32 0.0, %v464
        %466 = vdwg.mxu0
        %467 = vmatpush.msra.mxu0 0.0
        %468 = vmatpush.msra.mxu0 0.0
        %469 = vmatpush.msra.mxu0 0.0
        %470 = vmatpush.msra.mxu0 0.0
        %471 = vmatpush.msra.mxu0 0.0
        %472 = vmatpush.msra.mxu0 0.0
        %473 = vmatpush.msra.mxu0 0.0
        %474 = vmatpush.msra.mxu0 0.0
        %475 = vmatpush.msra.mxu0 0.0
        %476 = vmatpush.msra.mxu0 0.0
        %477 = vmatpush.msra.mxu0 0.0
        %478 = vmatpush.msra.mxu0 0.0
        %479 = vmatpush.msra.mxu0 0.0
        %480 = vmatpush.msra.mxu0 0.0
        %481 = vmatpush.msra.mxu0 0.0
        %482 = vmatpush.msra.mxu0 %v440
        %483 = vmatmul.f32.gmra.mxu0 %v433
        %v484 = vpop.f32.mrf.mxu0
        %v485 = vadd.f32 0.0, %v484
        %486 = vmatmul.f32.gmra.mxu0 %v436
        %v487 = vpop.f32.mrf.mxu0
        %v488 = vadd.f32 0.0, %v487
        %489 = vdwg.mxu0
        %490 = vmatpush.msra.mxu0 0.0
        %491 = vmatpush.msra.mxu0 0.0
        %492 = vmatpush.msra.mxu0 0.0
        %493 = vmatpush.msra.mxu0 0.0
        %494 = vmatpush.msra.mxu0 0.0
        %495 = vmatpush.msra.mxu0 0.0
        %496 = vmatpush.msra.mxu0 0.0
        %497 = vmatpush.msra.mxu0 0.0
        %498 = vmatpush.msra.mxu0 0.0
        %499 = vmatpush.msra.mxu0 0.0
        %500 = vmatpush.msra.mxu0 0.0
        %501 = vmatpush.msra.mxu0 0.0
        %502 = vmatpush.msra.mxu0 0.0
        %503 = vmatpush.msra.mxu0 0.0
        %504 = vmatpush.msra.mxu0 0.0
        %505 = vmatpush.msra.mxu0 %v442
        %506 = vmatmul.f32.gmra.mxu0 %v433
        %v507 = vpop.f32.mrf.mxu0
        %v508 = vadd.f32 0.0, %v507
        %509 = vmatmul.f32.gmra.mxu0 %v436
        %v510 = vpop.f32.mrf.mxu0
        %v511 = vadd.f32 0.0, %v510
        %512 = vdwg.mxu0
        %v513 = vadd.f32 %v355, %v462
        %v514 = vadd.f32 %v378, %v485
        %v515 = vadd.f32 %v401, %v508
        %v516 = vadd.f32 %v358, %v465
        %v517 = vadd.f32 %v381, %v488
        %v518 = vadd.f32 %v404, %v511
        %v519 = vld [vmem:[%s202] sm:$0xff]
        %v520 = vld [vmem:[%s202 + $0x8] sm:$0xff]
        %s521 = scalar_lea.vmem %s0, 48
        %v522 = vld [vmem:[%s521] sm:$0xff]
        %v523 = vld [vmem:[%s521 + $0x8] sm:$0xff]
        %526 = vst [vmem:[#allocation1] ss:$2 sm:$0xff] %v519
        %s527 = scalar_lea.vmem [#allocation1], 16
        %528 = vst [vmem:[%s527] ss:$2 sm:$0xff] %v520
        %v529 = vld.sshfl [vmem:[#allocation1] sm:$0xff pattern:$0x75316420]
        %v530 = vld.sshfl [vmem:[#allocation1 + $0x8] sm:$0xff pattern:$0x75316420]
        %v531 = vld.sshfl [vmem:[#allocation1 + $0x10] sm:$0xff pattern:$0x75316420]
        %v532 = vld.sshfl [vmem:[#allocation1 + $0x18] sm:$0xff pattern:$0x75316420]
        %533 = vrot.lane.b32.xlu0 %v529, 110
        %v534 = vpop.permute.xlu0 %533
        %535 = vrot.lane.b32.xlu0 %v530, 110
        %v536 = vpop.permute.xlu0 %535
        %537 = vrot.lane.b32.xlu0 %v531, 110
        %v538 = vpop.permute.xlu0 %537
        %539 = vrot.lane.b32.xlu0 %v532, 110
        %v540 = vpop.permute.xlu0 %539
        %vm541 = vcmask 900096
        %v542 = vsel %vm541, %v534, %v536
        %v543 = vsel %vm541, %v536, %v538
        %v544 = vsel %vm541, %v538, %v540
        %v546 = vsel %vm234, %v522, 0
        %v549 = vsel %vm234, %v523, 0
        %v551 = vsel %vm241, %v542, 0
        %v553 = vsel %vm241, %v543, 0
        %v555 = vsel %vm241, %v544, 0
        %557 = vmatpush.msra.mxu0 0.0
        %558 = vmatpush.msra.mxu0 0.0
        %559 = vmatpush.msra.mxu0 0.0
        %560 = vmatpush.msra.mxu0 0.0
        %561 = vmatpush.msra.mxu0 0.0
        %562 = vmatpush.msra.mxu0 0.0
        %563 = vmatpush.msra.mxu0 0.0
        %564 = vmatpush.msra.mxu0 0.0
        %565 = vmatpush.msra.mxu0 0.0
        %566 = vmatpush.msra.mxu0 0.0
        %567 = vmatpush.msra.mxu0 0.0
        %568 = vmatpush.msra.mxu0 0.0
        %569 = vmatpush.msra.mxu0 0.0
        %570 = vmatpush.msra.mxu0 0.0
        %571 = vmatpush.msra.mxu0 0.0
        %572 = vmatpush.msra.mxu0 %v551
        %573 = vmatmul.f32.gmra.mxu0 %v546
        %v574 = vpop.f32.mrf.mxu0
        %v575 = vadd.f32 0.0, %v574
        %576 = vmatmul.f32.gmra.mxu0 %v549
        %v577 = vpop.f32.mrf.mxu0
        %v578 = vadd.f32 0.0, %v577
        %579 = vdwg.mxu0
        %580 = vmatpush.msra.mxu0 0.0
        %581 = vmatpush.msra.mxu0 0.0
        %582 = vmatpush.msra.mxu0 0.0
        %583 = vmatpush.msra.mxu0 0.0
        %584 = vmatpush.msra.mxu0 0.0
        %585 = vmatpush.msra.mxu0 0.0
        %586 = vmatpush.msra.mxu0 0.0
        %587 = vmatpush.msra.mxu0 0.0
        %588 = vmatpush.msra.mxu0 0.0
        %589 = vmatpush.msra.mxu0 0.0
        %590 = vmatpush.msra.mxu0 0.0
        %591 = vmatpush.msra.mxu0 0.0
        %592 = vmatpush.msra.mxu0 0.0
        %593 = vmatpush.msra.mxu0 0.0
        %594 = vmatpush.msra.mxu0 0.0
        %595 = vmatpush.msra.mxu0 %v553
        %596 = vmatmul.f32.gmra.mxu0 %v546
        %v597 = vpop.f32.mrf.mxu0
        %v598 = vadd.f32 0.0, %v597
        %599 = vmatmul.f32.gmra.mxu0 %v549
        %v600 = vpop.f32.mrf.mxu0
        %v601 = vadd.f32 0.0, %v600
        %602 = vdwg.mxu0
        %603 = vmatpush.msra.mxu0 0.0
        %604 = vmatpush.msra.mxu0 0.0
        %605 = vmatpush.msra.mxu0 0.0
        %606 = vmatpush.msra.mxu0 0.0
        %607 = vmatpush.msra.mxu0 0.0
        %608 = vmatpush.msra.mxu0 0.0
        %609 = vmatpush.msra.mxu0 0.0
        %610 = vmatpush.msra.mxu0 0.0
        %611 = vmatpush.msra.mxu0 0.0
        %612 = vmatpush.msra.mxu0 0.0
        %613 = vmatpush.msra.mxu0 0.0
        %614 = vmatpush.msra.mxu0 0.0
        %615 = vmatpush.msra.mxu0 0.0
        %616 = vmatpush.msra.mxu0 0.0
        %617 = vmatpush.msra.mxu0 0.0
        %618 = vmatpush.msra.mxu0 %v555
        %619 = vmatmul.f32.gmra.mxu0 %v546
        %v620 = vpop.f32.mrf.mxu0
        %v621 = vadd.f32 0.0, %v620
        %622 = vmatmul.f32.gmra.mxu0 %v549
        %v623 = vpop.f32.mrf.mxu0
        %v624 = vadd.f32 0.0, %v623
        %625 = vdwg.mxu0
        %v626 = vadd.f32 %v513, %v575
        %v627 = vadd.f32 %v514, %v598
        %v628 = vadd.f32 %v515, %v621
        %v629 = vadd.f32 %v516, %v578
        %v630 = vadd.f32 %v517, %v601
        %v631 = vadd.f32 %v518, %v624
        %v632 = vld [vmem:[%s202] sm:$0xff]
        %v633 = vld [vmem:[%s202 + $0x8] sm:$0xff]
        %s634 = scalar_lea.vmem %s0, 64
        %v635 = vld [vmem:[%s634] sm:$0xff]
        %v636 = vld [vmem:[%s634 + $0x8] sm:$0xff]
        %639 = vst [vmem:[#allocation1] ss:$2 sm:$0xff] %v632
        %s640 = scalar_lea.vmem [#allocation1], 16
        %641 = vst [vmem:[%s640] ss:$2 sm:$0xff] %v633
        %v642 = vld.sshfl [vmem:[#allocation1] sm:$0xff pattern:$0x75316420]
        %v643 = vld.sshfl [vmem:[#allocation1 + $0x8] sm:$0xff pattern:$0x75316420]
        %v644 = vld.sshfl [vmem:[#allocation1 + $0x10] sm:$0xff pattern:$0x75316420]
        %v645 = vld.sshfl [vmem:[#allocation1 + $0x18] sm:$0xff pattern:$0x75316420]
        %646 = vrot.lane.b32.xlu0 %v642, 109
        %v647 = vpop.permute.xlu0 %646
        %648 = vrot.lane.b32.xlu0 %v643, 109
        %v649 = vpop.permute.xlu0 %648
        %650 = vrot.lane.b32.xlu0 %v644, 109
        %v651 = vpop.permute.xlu0 %650
        %652 = vrot.lane.b32.xlu0 %v645, 109
        %v653 = vpop.permute.xlu0 %652
        %vm654 = vcmask 891904
        %v655 = vsel %vm654, %v647, %v649
        %v656 = vsel %vm654, %v649, %v651
        %v657 = vsel %vm654, %v651, %v653
        %v659 = vsel %vm234, %v635, 0
        %v662 = vsel %vm234, %v636, 0
        %v664 = vsel %vm241, %v655, 0
        %v666 = vsel %vm241, %v656, 0
        %v668 = vsel %vm241, %v657, 0
        %670 = vmatpush.msra.mxu0 0.0
        %671 = vmatpush.msra.mxu0 0.0
        %672 = vmatpush.msra.mxu0 0.0
        %673 = vmatpush.msra.mxu0 0.0
        %674 = vmatpush.msra.mxu0 0.0
        %675 = vmatpush.msra.mxu0 0.0
        %676 = vmatpush.msra.mxu0 0.0
        %677 = vmatpush.msra.mxu0 0.0
        %678 = vmatpush.msra.mxu0 0.0
        %679 = vmatpush.msra.mxu0 0.0
        %680 = vmatpush.msra.mxu0 0.0
        %681 = vmatpush.msra.mxu0 0.0
        %682 = vmatpush.msra.mxu0 0.0
        %683 = vmatpush.msra.mxu0 0.0
        %684 = vmatpush.msra.mxu0 0.0
        %685 = vmatpush.msra.mxu0 %v664
        %686 = vmatmul.f32.gmra.mxu0 %v659
        %v687 = vpop.f32.mrf.mxu0
        %v688 = vadd.f32 0.0, %v687
        %689 = vmatmul.f32.gmra.mxu0 %v662
        %v690 = vpop.f32.mrf.mxu0
        %v691 = vadd.f32 0.0, %v690
        %692 = vdwg.mxu0
        %693 = vmatpush.msra.mxu0 0.0
        %694 = vmatpush.msra.mxu0 0.0
        %695 = vmatpush.msra.mxu0 0.0
        %696 = vmatpush.msra.mxu0 0.0
        %697 = vmatpush.msra.mxu0 0.0
        %698 = vmatpush.msra.mxu0 0.0
        %699 = vmatpush.msra.mxu0 0.0
        %700 = vmatpush.msra.mxu0 0.0
        %701 = vmatpush.msra.mxu0 0.0
        %702 = vmatpush.msra.mxu0 0.0
        %703 = vmatpush.msra.mxu0 0.0
        %704 = vmatpush.msra.mxu0 0.0
        %705 = vmatpush.msra.mxu0 0.0
        %706 = vmatpush.msra.mxu0 0.0
        %707 = vmatpush.msra.mxu0 0.0
        %708 = vmatpush.msra.mxu0 %v666
        %709 = vmatmul.f32.gmra.mxu0 %v659
        %v710 = vpop.f32.mrf.mxu0
        %v711 = vadd.f32 0.0, %v710
        %712 = vmatmul.f32.gmra.mxu0 %v662
        %v713 = vpop.f32.mrf.mxu0
        %v714 = vadd.f32 0.0, %v713
        %715 = vdwg.mxu0
        %716 = vmatpush.msra.mxu0 0.0
        %717 = vmatpush.msra.mxu0 0.0
        %718 = vmatpush.msra.mxu0 0.0
        %719 = vmatpush.msra.mxu0 0.0
        %720 = vmatpush.msra.mxu0 0.0
        %721 = vmatpush.msra.mxu0 0.0
        %722 = vmatpush.msra.mxu0 0.0
        %723 = vmatpush.msra.mxu0 0.0
        %724 = vmatpush.msra.mxu0 0.0
        %725 = vmatpush.msra.mxu0 0.0
        %726 = vmatpush.msra.mxu0 0.0
        %727 = vmatpush.msra.mxu0 0.0
        %728 = vmatpush.msra.mxu0 0.0
        %729 = vmatpush.msra.mxu0 0.0
        %730 = vmatpush.msra.mxu0 0.0
        %731 = vmatpush.msra.mxu0 %v668
        %732 = vmatmul.f32.gmra.mxu0 %v659
        %v733 = vpop.f32.mrf.mxu0
        %v734 = vadd.f32 0.0, %v733
        %735 = vmatmul.f32.gmra.mxu0 %v662
        %v736 = vpop.f32.mrf.mxu0
        %v737 = vadd.f32 0.0, %v736
        %738 = vdwg.mxu0
        %v739 = vadd.f32 %v626, %v688
        %v740 = vadd.f32 %v627, %v711
        %v741 = vadd.f32 %v628, %v734
        %v742 = vadd.f32 %v629, %v691
        %v743 = vadd.f32 %v630, %v714
        %v744 = vadd.f32 %v631, %v737
        %v745 = vld [vmem:[%s202] sm:$0xff]
        %v746 = vld [vmem:[%s202 + $0x8] sm:$0xff]
        %s747 = scalar_lea.vmem %s0, 80
        %v748 = vld [vmem:[%s747] sm:$0xff]
        %v749 = vld [vmem:[%s747 + $0x8] sm:$0xff]
        %752 = vst [vmem:[#allocation1] ss:$2 sm:$0xff] %v745
        %s753 = scalar_lea.vmem [#allocation1], 16
        %754 = vst [vmem:[%s753] ss:$2 sm:$0xff] %v746
        %v755 = vld.sshfl [vmem:[#allocation1] sm:$0xff pattern:$0x75316420]
        %v756 = vld.sshfl [vmem:[#allocation1 + $0x8] sm:$0xff pattern:$0x75316420]
        %v757 = vld.sshfl [vmem:[#allocation1 + $0x10] sm:$0xff pattern:$0x75316420]
        %v758 = vld.sshfl [vmem:[#allocation1 + $0x18] sm:$0xff pattern:$0x75316420]
        %759 = vrot.lane.b32.xlu0 %v755, 108
        %v760 = vpop.permute.xlu0 %759
        %761 = vrot.lane.b32.xlu0 %v756, 108
        %v762 = vpop.permute.xlu0 %761
        %763 = vrot.lane.b32.xlu0 %v757, 108
        %v764 = vpop.permute.xlu0 %763
        %765 = vrot.lane.b32.xlu0 %v758, 108
        %v766 = vpop.permute.xlu0 %765
        %vm767 = vcmask 883712
        %v768 = vsel %vm767, %v760, %v762
        %v769 = vsel %vm767, %v762, %v764
        %v770 = vsel %vm767, %v764, %v766
        %v772 = vsel %vm234, %v748, 0
        %v775 = vsel %vm234, %v749, 0
        %v777 = vsel %vm241, %v768, 0
        %v779 = vsel %vm241, %v769, 0
        %v781 = vsel %vm241, %v770, 0
        %783 = vmatpush.msra.mxu0 0.0
        %784 = vmatpush.msra.mxu0 0.0
        %785 = vmatpush.msra.mxu0 0.0
        %786 = vmatpush.msra.mxu0 0.0
        %787 = vmatpush.msra.mxu0 0.0
        %788 = vmatpush.msra.mxu0 0.0
        %789 = vmatpush.msra.mxu0 0.0
        %790 = vmatpush.msra.mxu0 0.0
        %791 = vmatpush.msra.mxu0 0.0
        %792 = vmatpush.msra.mxu0 0.0
        %793 = vmatpush.msra.mxu0 0.0
        %794 = vmatpush.msra.mxu0 0.0
        %795 = vmatpush.msra.mxu0 0.0
        %796 = vmatpush.msra.mxu0 0.0
        %797 = vmatpush.msra.mxu0 0.0
        %798 = vmatpush.msra.mxu0 %v777
        %799 = vmatmul.f32.gmra.mxu0 %v772
        %v800 = vpop.f32.mrf.mxu0
        %v801 = vadd.f32 0.0, %v800
        %802 = vmatmul.f32.gmra.mxu0 %v775
        %v803 = vpop.f32.mrf.mxu0
        %v804 = vadd.f32 0.0, %v803
        %805 = vdwg.mxu0
        %806 = vmatpush.msra.mxu0 0.0
        %807 = vmatpush.msra.mxu0 0.0
        %808 = vmatpush.msra.mxu0 0.0
        %809 = vmatpush.msra.mxu0 0.0
        %810 = vmatpush.msra.mxu0 0.0
        %811 = vmatpush.msra.mxu0 0.0
        %812 = vmatpush.msra.mxu0 0.0
        %813 = vmatpush.msra.mxu0 0.0
        %814 = vmatpush.msra.mxu0 0.0
        %815 = vmatpush.msra.mxu0 0.0
        %816 = vmatpush.msra.mxu0 0.0
        %817 = vmatpush.msra.mxu0 0.0
        %818 = vmatpush.msra.mxu0 0.0
        %819 = vmatpush.msra.mxu0 0.0
        %820 = vmatpush.msra.mxu0 0.0
        %821 = vmatpush.msra.mxu0 %v779
        %822 = vmatmul.f32.gmra.mxu0 %v772
        %v823 = vpop.f32.mrf.mxu0
        %v824 = vadd.f32 0.0, %v823
        %825 = vmatmul.f32.gmra.mxu0 %v775
        %v826 = vpop.f32.mrf.mxu0
        %v827 = vadd.f32 0.0, %v826
        %828 = vdwg.mxu0
        %829 = vmatpush.msra.mxu0 0.0
        %830 = vmatpush.msra.mxu0 0.0
        %831 = vmatpush.msra.mxu0 0.0
        %832 = vmatpush.msra.mxu0 0.0
        %833 = vmatpush.msra.mxu0 0.0
        %834 = vmatpush.msra.mxu0 0.0
        %835 = vmatpush.msra.mxu0 0.0
        %836 = vmatpush.msra.mxu0 0.0
        %837 = vmatpush.msra.mxu0 0.0
        %838 = vmatpush.msra.mxu0 0.0
        %839 = vmatpush.msra.mxu0 0.0
        %840 = vmatpush.msra.mxu0 0.0
        %841 = vmatpush.msra.mxu0 0.0
        %842 = vmatpush.msra.mxu0 0.0
        %843 = vmatpush.msra.mxu0 0.0
        %844 = vmatpush.msra.mxu0 %v781
        %845 = vmatmul.f32.gmra.mxu0 %v772
        %v846 = vpop.f32.mrf.mxu0
        %v847 = vadd.f32 0.0, %v846
        %848 = vmatmul.f32.gmra.mxu0 %v775
        %v849 = vpop.f32.mrf.mxu0
        %v850 = vadd.f32 0.0, %v849
        %851 = vdwg.mxu0
        %v852 = vadd.f32 %v739, %v801
        %v853 = vadd.f32 %v740, %v824
        %v854 = vadd.f32 %v741, %v847
        %v855 = vadd.f32 %v742, %v804
        %v856 = vadd.f32 %v743, %v827
        %v857 = vadd.f32 %v744, %v850
        %v858 = vld [vmem:[%s202] sm:$0xff]
        %v859 = vld [vmem:[%s202 + $0x8] sm:$0xff]
        %s860 = scalar_lea.vmem %s0, 96
        %v861 = vld [vmem:[%s860] sm:$0xff]
        %v862 = vld [vmem:[%s860 + $0x8] sm:$0xff]
        %865 = vst [vmem:[#allocation1] ss:$2 sm:$0xff] %v858
        %s866 = scalar_lea.vmem [#allocation1], 16
        %867 = vst [vmem:[%s866] ss:$2 sm:$0xff] %v859
        %v868 = vld.sshfl [vmem:[#allocation1] sm:$0xff pattern:$0x75316420]
        %v869 = vld.sshfl [vmem:[#allocation1 + $0x8] sm:$0xff pattern:$0x75316420]
        %v870 = vld.sshfl [vmem:[#allocation1 + $0x10] sm:$0xff pattern:$0x75316420]
        %v871 = vld.sshfl [vmem:[#allocation1 + $0x18] sm:$0xff pattern:$0x75316420]
        %872 = vrot.lane.b32.xlu0 %v868, 92
        %v873 = vpop.permute.xlu0 %872
        %874 = vrot.lane.b32.xlu0 %v869, 92
        %v875 = vpop.permute.xlu0 %874
        %876 = vrot.lane.b32.xlu0 %v870, 92
        %v877 = vpop.permute.xlu0 %876
        %878 = vrot.lane.b32.xlu0 %v871, 92
        %v879 = vpop.permute.xlu0 %878
        %vm880 = vcmask 752640
        %v881 = vsel %vm880, %v873, %v875
        %v882 = vsel %vm880, %v875, %v877
        %v883 = vsel %vm880, %v877, %v879
        %v885 = vsel %vm234, %v861, 0
        %v888 = vsel %vm234, %v862, 0
        %v890 = vsel %vm241, %v881, 0
        %v892 = vsel %vm241, %v882, 0
        %v894 = vsel %vm241, %v883, 0
        %896 = vmatpush.msra.mxu0 0.0
        %897 = vmatpush.msra.mxu0 0.0
        %898 = vmatpush.msra.mxu0 0.0
        %899 = vmatpush.msra.mxu0 0.0
        %900 = vmatpush.msra.mxu0 0.0
        %901 = vmatpush.msra.mxu0 0.0
        %902 = vmatpush.msra.mxu0 0.0
        %903 = vmatpush.msra.mxu0 0.0
        %904 = vmatpush.msra.mxu0 0.0
        %905 = vmatpush.msra.mxu0 0.0
        %906 = vmatpush.msra.mxu0 0.0
        %907 = vmatpush.msra.mxu0 0.0
        %908 = vmatpush.msra.mxu0 0.0
        %909 = vmatpush.msra.mxu0 0.0
        %910 = vmatpush.msra.mxu0 0.0
        %911 = vmatpush.msra.mxu0 %v890
        %912 = vmatmul.f32.gmra.mxu0 %v885
        %v913 = vpop.f32.mrf.mxu0
        %v914 = vadd.f32 0.0, %v913
        %915 = vmatmul.f32.gmra.mxu0 %v888
        %v916 = vpop.f32.mrf.mxu0
        %v917 = vadd.f32 0.0, %v916
        %918 = vdwg.mxu0
        %919 = vmatpush.msra.mxu0 0.0
        %920 = vmatpush.msra.mxu0 0.0
        %921 = vmatpush.msra.mxu0 0.0
        %922 = vmatpush.msra.mxu0 0.0
        %923 = vmatpush.msra.mxu0 0.0
        %924 = vmatpush.msra.mxu0 0.0
        %925 = vmatpush.msra.mxu0 0.0
        %926 = vmatpush.msra.mxu0 0.0
        %927 = vmatpush.msra.mxu0 0.0
        %928 = vmatpush.msra.mxu0 0.0
        %929 = vmatpush.msra.mxu0 0.0
        %930 = vmatpush.msra.mxu0 0.0
        %931 = vmatpush.msra.mxu0 0.0
        %932 = vmatpush.msra.mxu0 0.0
        %933 = vmatpush.msra.mxu0 0.0
        %934 = vmatpush.msra.mxu0 %v892
        %935 = vmatmul.f32.gmra.mxu0 %v885
        %v936 = vpop.f32.mrf.mxu0
        %v937 = vadd.f32 0.0, %v936
        %938 = vmatmul.f32.gmra.mxu0 %v888
        %v939 = vpop.f32.mrf.mxu0
        %v940 = vadd.f32 0.0, %v939
        %941 = vdwg.mxu0
        %942 = vmatpush.msra.mxu0 0.0
        %943 = vmatpush.msra.mxu0 0.0
        %944 = vmatpush.msra.mxu0 0.0
        %945 = vmatpush.msra.mxu0 0.0
        %946 = vmatpush.msra.mxu0 0.0
        %947 = vmatpush.msra.mxu0 0.0
        %948 = vmatpush.msra.mxu0 0.0
        %949 = vmatpush.msra.mxu0 0.0
        %950 = vmatpush.msra.mxu0 0.0
        %951 = vmatpush.msra.mxu0 0.0
        %952 = vmatpush.msra.mxu0 0.0
        %953 = vmatpush.msra.mxu0 0.0
        %954 = vmatpush.msra.mxu0 0.0
        %955 = vmatpush.msra.mxu0 0.0
        %956 = vmatpush.msra.mxu0 0.0
        %957 = vmatpush.msra.mxu0 %v894
        %958 = vmatmul.f32.gmra.mxu0 %v885
        %v959 = vpop.f32.mrf.mxu0
        %v960 = vadd.f32 0.0, %v959
        %961 = vmatmul.f32.gmra.mxu0 %v888
        %v962 = vpop.f32.mrf.mxu0
        %v963 = vadd.f32 0.0, %v962
        %964 = vdwg.mxu0
        %v965 = vadd.f32 %v852, %v914
        %v966 = vadd.f32 %v853, %v937
        %v967 = vadd.f32 %v854, %v960
        %v968 = vadd.f32 %v855, %v917
        %v969 = vadd.f32 %v856, %v940
        %v970 = vadd.f32 %v857, %v963
        %v971 = vld [vmem:[%s202] sm:$0xff]
        %v972 = vld [vmem:[%s202 + $0x8] sm:$0xff]
        %s973 = scalar_lea.vmem %s0, 112
        %v974 = vld [vmem:[%s973] sm:$0xff]
        %v975 = vld [vmem:[%s973 + $0x8] sm:$0xff]
        %978 = vst [vmem:[#allocation1] ss:$2 sm:$0xff] %v971
        %s979 = scalar_lea.vmem [#allocation1], 16
        %980 = vst [vmem:[%s979] ss:$2 sm:$0xff] %v972
        %v981 = vld.sshfl [vmem:[#allocation1] sm:$0xff pattern:$0x75316420]
        %v982 = vld.sshfl [vmem:[#allocation1 + $0x8] sm:$0xff pattern:$0x75316420]
        %v983 = vld.sshfl [vmem:[#allocation1 + $0x10] sm:$0xff pattern:$0x75316420]
        %v984 = vld.sshfl [vmem:[#allocation1 + $0x18] sm:$0xff pattern:$0x75316420]
        %985 = vrot.lane.b32.xlu0 %v981, 91
        %v986 = vpop.permute.xlu0 %985
        %987 = vrot.lane.b32.xlu0 %v982, 91
        %v988 = vpop.permute.xlu0 %987
        %989 = vrot.lane.b32.xlu0 %v983, 91
        %v990 = vpop.permute.xlu0 %989
        %991 = vrot.lane.b32.xlu0 %v984, 91
        %v992 = vpop.permute.xlu0 %991
        %vm993 = vcmask 744448
        %v994 = vsel %vm993, %v986, %v988
        %v995 = vsel %vm993, %v988, %v990
        %v996 = vsel %vm993, %v990, %v992
        %v998 = vsel %vm234, %v974, 0
        %v1001 = vsel %vm234, %v975, 0
        %v1003 = vsel %vm241, %v994, 0
        %v1005 = vsel %vm241, %v995, 0
        %v1007 = vsel %vm241, %v996, 0
        %1009 = vmatpush.msra.mxu0 0.0
        %1010 = vmatpush.msra.mxu0 0.0
        %1011 = vmatpush.msra.mxu0 0.0
        %1012 = vmatpush.msra.mxu0 0.0
        %1013 = vmatpush.msra.mxu0 0.0
        %1014 = vmatpush.msra.mxu0 0.0
        %1015 = vmatpush.msra.mxu0 0.0
        %1016 = vmatpush.msra.mxu0 0.0
        %1017 = vmatpush.msra.mxu0 0.0
        %1018 = vmatpush.msra.mxu0 0.0
        %1019 = vmatpush.msra.mxu0 0.0
        %1020 = vmatpush.msra.mxu0 0.0
        %1021 = vmatpush.msra.mxu0 0.0
        %1022 = vmatpush.msra.mxu0 0.0
        %1023 = vmatpush.msra.mxu0 0.0
        %1024 = vmatpush.msra.mxu0 %v1003
        %1025 = vmatmul.f32.gmra.mxu0 %v998
        %v1026 = vpop.f32.mrf.mxu0
        %v1027 = vadd.f32 0.0, %v1026
        %1028 = vmatmul.f32.gmra.mxu0 %v1001
        %v1029 = vpop.f32.mrf.mxu0
        %v1030 = vadd.f32 0.0, %v1029
        %1031 = vdwg.mxu0
        %1032 = vmatpush.msra.mxu0 0.0
        %1033 = vmatpush.msra.mxu0 0.0
        %1034 = vmatpush.msra.mxu0 0.0
        %1035 = vmatpush.msra.mxu0 0.0
        %1036 = vmatpush.msra.mxu0 0.0
        %1037 = vmatpush.msra.mxu0 0.0
        %1038 = vmatpush.msra.mxu0 0.0
        %1039 = vmatpush.msra.mxu0 0.0
        %1040 = vmatpush.msra.mxu0 0.0
        %1041 = vmatpush.msra.mxu0 0.0
        %1042 = vmatpush.msra.mxu0 0.0
        %1043 = vmatpush.msra.mxu0 0.0
        %1044 = vmatpush.msra.mxu0 0.0
        %1045 = vmatpush.msra.mxu0 0.0
        %1046 = vmatpush.msra.mxu0 0.0
        %1047 = vmatpush.msra.mxu0 %v1005
        %1048 = vmatmul.f32.gmra.mxu0 %v998
        %v1049 = vpop.f32.mrf.mxu0
        %v1050 = vadd.f32 0.0, %v1049
        %1051 = vmatmul.f32.gmra.mxu0 %v1001
        %v1052 = vpop.f32.mrf.mxu0
        %v1053 = vadd.f32 0.0, %v1052
        %1054 = vdwg.mxu0
        %1055 = vmatpush.msra.mxu0 0.0
        %1056 = vmatpush.msra.mxu0 0.0
        %1057 = vmatpush.msra.mxu0 0.0
        %1058 = vmatpush.msra.mxu0 0.0
        %1059 = vmatpush.msra.mxu0 0.0
        %1060 = vmatpush.msra.mxu0 0.0
        %1061 = vmatpush.msra.mxu0 0.0
        %1062 = vmatpush.msra.mxu0 0.0
        %1063 = vmatpush.msra.mxu0 0.0
        %1064 = vmatpush.msra.mxu0 0.0
        %1065 = vmatpush.msra.mxu0 0.0
        %1066 = vmatpush.msra.mxu0 0.0
        %1067 = vmatpush.msra.mxu0 0.0
        %1068 = vmatpush.msra.mxu0 0.0
        %1069 = vmatpush.msra.mxu0 0.0
        %1070 = vmatpush.msra.mxu0 %v1007
        %1071 = vmatmul.f32.gmra.mxu0 %v998
        %v1072 = vpop.f32.mrf.mxu0
        %v1073 = vadd.f32 0.0, %v1072
        %1074 = vmatmul.f32.gmra.mxu0 %v1001
        %v1075 = vpop.f32.mrf.mxu0
        %v1076 = vadd.f32 0.0, %v1075
        %1077 = vdwg.mxu0
        %v1078 = vadd.f32 %v965, %v1027
        %v1079 = vadd.f32 %v966, %v1050
        %v1080 = vadd.f32 %v967, %v1073
        %v1081 = vadd.f32 %v968, %v1030
        %v1082 = vadd.f32 %v969, %v1053
        %v1083 = vadd.f32 %v970, %v1076
        %v1084 = vld [vmem:[%s202] sm:$0xff]
        %v1085 = vld [vmem:[%s202 + $0x8] sm:$0xff]
        %s1086 = scalar_lea.vmem %s0, 128
        %v1087 = vld [vmem:[%s1086] sm:$0xff]
        %v1088 = vld [vmem:[%s1086 + $0x8] sm:$0xff]
        %1091 = vst [vmem:[#allocation1] ss:$2 sm:$0xff] %v1084
        %s1092 = scalar_lea.vmem [#allocation1], 16
        %1093 = vst [vmem:[%s1092] ss:$2 sm:$0xff] %v1085
        %v1094 = vld.sshfl [vmem:[#allocation1] sm:$0xff pattern:$0x75316420]
        %v1095 = vld.sshfl [vmem:[#allocation1 + $0x8] sm:$0xff pattern:$0x75316420]
        %v1096 = vld.sshfl [vmem:[#allocation1 + $0x10] sm:$0xff pattern:$0x75316420]
        %v1097 = vld.sshfl [vmem:[#allocation1 + $0x18] sm:$0xff pattern:$0x75316420]
        %1098 = vrot.lane.b32.xlu0 %v1094, 90
        %v1099 = vpop.permute.xlu0 %1098
        %1100 = vrot.lane.b32.xlu0 %v1095, 90
        %v1101 = vpop.permute.xlu0 %1100
        %1102 = vrot.lane.b32.xlu0 %v1096, 90
        %v1103 = vpop.permute.xlu0 %1102
        %1104 = vrot.lane.b32.xlu0 %v1097, 90
        %v1105 = vpop.permute.xlu0 %1104
        %vm1106 = vcmask 736256
        %v1107 = vsel %vm1106, %v1099, %v1101
        %v1108 = vsel %vm1106, %v1101, %v1103
        %v1109 = vsel %vm1106, %v1103, %v1105
        %v1111 = vsel %vm234, %v1087, 0
        %v1114 = vsel %vm234, %v1088, 0
        %v1116 = vsel %vm241, %v1107, 0
        %v1118 = vsel %vm241, %v1108, 0
        %v1120 = vsel %vm241, %v1109, 0
        %1122 = vmatpush.msra.mxu0 0.0
        %1123 = vmatpush.msra.mxu0 0.0
        %1124 = vmatpush.msra.mxu0 0.0
        %1125 = vmatpush.msra.mxu0 0.0
        %1126 = vmatpush.msra.mxu0 0.0
        %1127 = vmatpush.msra.mxu0 0.0
        %1128 = vmatpush.msra.mxu0 0.0
        %1129 = vmatpush.msra.mxu0 0.0
        %1130 = vmatpush.msra.mxu0 0.0
        %1131 = vmatpush.msra.mxu0 0.0
        %1132 = vmatpush.msra.mxu0 0.0
        %1133 = vmatpush.msra.mxu0 0.0
        %1134 = vmatpush.msra.mxu0 0.0
        %1135 = vmatpush.msra.mxu0 0.0
        %1136 = vmatpush.msra.mxu0 0.0
        %1137 = vmatpush.msra.mxu0 %v1116
        %1138 = vmatmul.f32.gmra.mxu0 %v1111
        %v1139 = vpop.f32.mrf.mxu0
        %v1140 = vadd.f32 0.0, %v1139
        %1141 = vmatmul.f32.gmra.mxu0 %v1114
        %v1142 = vpop.f32.mrf.mxu0
        %v1143 = vadd.f32 0.0, %v1142
        %1144 = vdwg.mxu0
        %1145 = vmatpush.msra.mxu0 0.0
        %1146 = vmatpush.msra.mxu0 0.0
        %1147 = vmatpush.msra.mxu0 0.0
        %1148 = vmatpush.msra.mxu0 0.0
        %1149 = vmatpush.msra.mxu0 0.0
        %1150 = vmatpush.msra.mxu0 0.0
        %1151 = vmatpush.msra.mxu0 0.0
        %1152 = vmatpush.msra.mxu0 0.0
        %1153 = vmatpush.msra.mxu0 0.0
        %1154 = vmatpush.msra.mxu0 0.0
        %1155 = vmatpush.msra.mxu0 0.0
        %1156 = vmatpush.msra.mxu0 0.0
        %1157 = vmatpush.msra.mxu0 0.0
        %1158 = vmatpush.msra.mxu0 0.0
        %1159 = vmatpush.msra.mxu0 0.0
        %1160 = vmatpush.msra.mxu0 %v1118
        %1161 = vmatmul.f32.gmra.mxu0 %v1111
        %v1162 = vpop.f32.mrf.mxu0
        %v1163 = vadd.f32 0.0, %v1162
        %1164 = vmatmul.f32.gmra.mxu0 %v1114
        %v1165 = vpop.f32.mrf.mxu0
        %v1166 = vadd.f32 0.0, %v1165
        %1167 = vdwg.mxu0
        %1168 = vmatpush.msra.mxu0 0.0
        %1169 = vmatpush.msra.mxu0 0.0
        %1170 = vmatpush.msra.mxu0 0.0
        %1171 = vmatpush.msra.mxu0 0.0
        %1172 = vmatpush.msra.mxu0 0.0
        %1173 = vmatpush.msra.mxu0 0.0
        %1174 = vmatpush.msra.mxu0 0.0
        %1175 = vmatpush.msra.mxu0 0.0
        %1176 = vmatpush.msra.mxu0 0.0
        %1177 = vmatpush.msra.mxu0 0.0
        %1178 = vmatpush.msra.mxu0 0.0
        %1179 = vmatpush.msra.mxu0 0.0
        %1180 = vmatpush.msra.mxu0 0.0
        %1181 = vmatpush.msra.mxu0 0.0
        %1182 = vmatpush.msra.mxu0 0.0
        %1183 = vmatpush.msra.mxu0 %v1120
        %1184 = vmatmul.f32.gmra.mxu0 %v1111
        %v1185 = vpop.f32.mrf.mxu0
        %v1186 = vadd.f32 0.0, %v1185
        %1187 = vmatmul.f32.gmra.mxu0 %v1114
        %v1188 = vpop.f32.mrf.mxu0
        %v1189 = vadd.f32 0.0, %v1188
        %1190 = vdwg.mxu0
        %v1191 = vadd.f32 %v1078, %v1140
        %v1192 = vadd.f32 %v1079, %v1163
        %v1193 = vadd.f32 %v1080, %v1186
        %v1194 = vadd.f32 %v1081, %v1143
        %v1195 = vadd.f32 %v1082, %v1166
        %v1196 = vadd.f32 %v1083, %v1189
        %v1197 = vld [vmem:[%s197] sm:$0xff]
        %v1198 = vld [vmem:[%s197 + $0x8] sm:$0xff]
        %s1199 = scalar_lea.vmem %s197, 16
        %v1200 = vld [vmem:[%s1199] sm:$0xff]
        %v1201 = vld [vmem:[%s1199 + $0x8] sm:$0xff]
        %1203 = vset.pattern.permute.xlu0 0
        %1204 = vperm.xlu0 %1203, %v1197
        %v1205 = vpop.permute.xlu0 %1204
        %1208 = vset.pattern.permute.xlu0 0
        %1209 = vperm.xlu0 %1208, %v1198
        %v1210 = vpop.permute.xlu0 %1209
        %v1212 = vmul.f32 %v1205, %v1191
        %v1213 = vmul.f32 %v1205, %v1192
        %v1214 = vmul.f32 %v1205, %v1193
        %v1215 = vmul.f32 %v1210, %v1194
        %v1216 = vmul.f32 %v1210, %v1195
        %v1217 = vmul.f32 %v1210, %v1196
        %1219 = vset.pattern.permute.xlu0 0
        %1220 = vperm.xlu0 %1219, %v1200
        %v1221 = vpop.permute.xlu0 %1220
        %1224 = vset.pattern.permute.xlu0 0
        %1225 = vperm.xlu0 %1224, %v1201
        %v1226 = vpop.permute.xlu0 %1225
        %v1228 = vadd.f32 %v1212, %v1221
        %v1229 = vadd.f32 %v1213, %v1221
        %v1230 = vadd.f32 %v1214, %v1221
        %v1231 = vadd.f32 %v1215, %v1226
        %v1232 = vadd.f32 %v1216, %v1226
        %v1233 = vadd.f32 %v1217, %v1226
        %v1234 = vmul.f32 %v1228, 0.1
        %v1235 = vmul.f32 %v1229, 0.1
        %v1236 = vmul.f32 %v1230, 0.1
        %v1237 = vmul.f32 %v1231, 0.1
        %v1238 = vmul.f32 %v1232, 0.1
        %v1239 = vmul.f32 %v1233, 0.1
        %v1240 = vmax.f32 %v1228, %v1234
        %v1241 = vmax.f32 %v1229, %v1235
        %v1242 = vmax.f32 %v1230, %v1236
        %v1243 = vmax.f32 %v1231, %v1237
        %v1244 = vmax.f32 %v1232, %v1238
        %v1245 = vmax.f32 %v1233, %v1239
        %1246 = vst [vmem:[%s192] sm:$0xff] %v1240
        %1247 = vst [vmem:[%s192 + $0x8] sm:$0xff] %v1241
        %1248 = vst [vmem:[%s192 + $0x10] sm:$0xff] %v1242
        %1249 = vst [vmem:[%s192 + $0x18] sm:$0xff] %v1243
        %1250 = vst [vmem:[%s192 + $0x20] sm:$0xff] %v1244
        %1251 = vst [vmem:[%s192 + $0x28] sm:$0xff] %v1245
        %s1252 = sand.u32 %s112, 1
        %s1253 = scalar_lea.sflag [#allocation3], %s1252
        %s1254 = sand.u32 %s112, 1
        %s1255 = smul.addr %s1254, 48
        %s1256 = scalar_lea.vmem [#allocation2], %s1255
        // Predicated region
        $region33: #{tpu_custom_call.1} parent=31 // pred_check
          %p1257 = pneg %p122
        $region34: #{tpu_custom_call.1} parent=31 // pred_check_branch
          %1259 = sbr.rel (%p1257) target = $region36
        $region35: #{tpu_custom_call.1} parent=31 // pred_region
          %s1260 = smul.u32 3, %s22
          %1262 = vsyncadd %s1253, 0
          %s1263 = smul.addr %s21, 6
          %s1264 = sadd.s32 %s1260, %s1263
          %s1265 = smul.addr %s1264, 8
          %s1266 = scalar_lea.hbm %s3, %s1265
          %s1267 = sshll.u32 %s1256, 4
          %s1268 = int_to_ptr.vmem [resolvable:$true] %s1267
          %s1269 = sshll.u32 %s1266, 4
          %s1270 = int_to_ptr.hbm [resolvable:$true] %s1269
          %1275 = dma.vmem_to_hbm [thread:$0]  %s1268, 768, %s1270, %s1253, 384, 384, 24
        $region36: #{tpu_custom_call.1} parent=31 // pred_fallthru
          _
      $region32: #{tpu_custom_call.1} parent=5 // pred_fallthru
        _
      %p1276 = scmp.le.s32.totalorder 2, %s12
      // Predicated region
      $region37: #{tpu_custom_call.1} parent=5 // pred_check
        %p1277 = pneg %p1276
      $region38: #{tpu_custom_call.1} parent=5 // pred_check_branch
        %1279 = sbr.rel (%p1277) target = $region40
      $region39: #{tpu_custom_call.1} parent=5 // pred_region
        %s1280 = ssub.s32 %s12, 2
        // Predicated region
        $region41: #{tpu_custom_call.1} parent=39 // pred_check
          %p1281 = pneg %p128
        $region42: #{tpu_custom_call.1} parent=39 // pred_check_branch
          %1283 = sbr.rel (%p1281) target = $region44
        $region43: #{tpu_custom_call.1} parent=39 // pred_region
          %s1284 = sand.u32 %s113, 1
          %s1285 = scalar_lea.sflag [#allocation3], %s1284
          %s1286 = sand.u32 %s113, 1
          %s1287 = smul.addr %s1286, 48
          %s1288 = scalar_lea.vmem [#allocation2], %s1287
          %1290 = dma.done %s1285, 768
        $region44: #{tpu_custom_call.1} parent=39 // pred_fallthru
          _
      $region40: #{tpu_custom_call.1} parent=5 // pred_fallthru
        _
    $region6: #{tpu_custom_call.1} parent=1 // loop_footer
      %s16 = sadd.s32 1, %s12
    $region7: #{tpu_custom_call.1} parent=1 // loop_footer_branch
      %11 = sbr.rel target = $region3
    $region8: #{tpu_custom_call.1} parent=1 // loop_exit
      _
    %1291 = vsyncpa [#allocation3], 1
    %s1292 = scalar_lea.sflag [#allocation3], 1
    %1293 = vsyncpa %s1292, 1

</llo_original>
